<compile_context>
chip_gen: v7x
topology: tpu7x:2x2x1
jax: 0.10.0
libtpu: 0.0.40
codegen_flags: <defaults>
</compile_context>

<pallas_src>
import jax
import jax.numpy as jnp
from jax import lax
from jax.experimental import pallas as pl
from jax.experimental.pallas import tpu as pltpu


def _swish_f32(h):
    # tanh form of swish: mathematically identical to h * sigmoid(h) but only
    # one EUP op (tanh) per element; the extra mul/add ride spare VPU slots.
    return 0.5 * h * (1.0 + jnp.tanh(0.5 * h))


def value_decoder_kernel(x_ref, w1_ref, b1_ref, w2_ref, b2_ref,
                         w3_ref, b3_ref, oT_ref):
    # x tile arrives in its natural [TB, nde] layout.
    x_bf = x_ref[...].astype(jnp.bfloat16)                          # [TB, nde]

    # layer 1 + swish: [h1, nde] x [TB, nde]^T -> [h1, TB] (lane-dense on TB).
    h = lax.dot_general(
        w1_ref[...], x_bf,
        dimension_numbers=(((1,), (1,)), ((), ())),                 # contract last dims
        preferred_element_type=jnp.float32) + b1_ref[...]
    h = _swish_f32(h)                                               # [h1, TB]

    # layer 2 + swish: [h2, h1] x [h1, TB] -> [h2, TB]
    h = jnp.dot(w2_ref[...], h.astype(jnp.bfloat16),
                preferred_element_type=jnp.float32) + b2_ref[...]
    h = _swish_f32(h)                                               # [h2, TB]

    # layer 3 (no activation): [ndv, h2] x [h2, TB] -> [ndv, TB]
    out = jnp.dot(w3_ref[...], h.astype(jnp.bfloat16),
                  preferred_element_type=jnp.float32) + b3_ref[...]
    oT_ref[...] = out.astype(oT_ref.dtype)                          # [ndv, TB]


def value_decoder_forward(x, params, *, batch_tile=8192):
    """x: [B, nde]. params: dict of w1,b1,w2,b2,w3,b3 (PyTorch [out, in] layout).

    Returns [B, ndv] (module parity).  Consumers that can accept the
    lane-dense [ndv, B] layout should take the pallas_call result directly
    and skip the final transpose.
    """
    w1, b1 = params["w1"], params["b1"]
    w2, b2 = params["w2"], params["b2"]
    w3, b3 = params["w3"], params["b3"]

    B, nde = x.shape
    h1, h2, ndv = w1.shape[0], w2.shape[0], w3.shape[0]

    # MXU operands in bf16 (accumulation stays f32 in-kernel); biases and all
    # elementwise math stay f32.  Weights are KB-scale, so this cast is free.
    w1b = w1.astype(jnp.bfloat16)
    w2b = w2.astype(jnp.bfloat16)
    w3b = w3.astype(jnp.bfloat16)

    # Batch tile: multiple of 128 lanes.  Cap at ~half the (128-rounded) batch
    # so the grid has >= 2 steps whenever B > 128 -> both v7x TensorCores get
    # work from the "parallel" batch axis (harmless on v5e/v6e).
    tb = max(128, 128 * (batch_tile // 128))
    if B > 128:
        half = 128 * pl.cdiv(pl.cdiv(B, 2), 128)
        tb = min(tb, half)
    else:
        tb = 128
    grid = (pl.cdiv(B, tb),)

    vmem = pltpu.MemorySpace.VMEM

    def resident(shape):
        # Constant block index -> operand stays resident in VMEM across steps.
        return pl.BlockSpec(shape, lambda i: (0, 0), memory_space=vmem)

    itemsize = jnp.dtype(x.dtype).itemsize
    cost = pl.CostEstimate(
        flops=2 * B * (nde * h1 + h1 * h2 + h2 * ndv),
        transcendentals=B * (h1 + h2),                 # one tanh per activation
        bytes_accessed=itemsize * B * (nde + ndv)
        + 2 * (nde * h1 + h1 * h2 + h2 * ndv)          # bf16 weights
        + 4 * (h1 + h2 + ndv),                         # f32 biases
    )

    oT = pl.pallas_call(
        value_decoder_kernel,
        out_shape=jax.ShapeDtypeStruct((ndv, B), x.dtype),
        grid=grid,
        in_specs=[
            # x marches along the batch axis in its natural layout -> pipelined.
            pl.BlockSpec((tb, nde), lambda i: (i, 0), memory_space=vmem),
            resident(w1b.shape), resident(b1.shape),
            resident(w2b.shape), resident(b2.shape),
            resident(w3b.shape), resident(b3.shape),
        ],
        # Lane-dense output blocks: batch on the 128-lane axis -> unmasked vst.
        out_specs=pl.BlockSpec((ndv, tb), lambda i: (0, i), memory_space=vmem),
        compiler_params=pltpu.CompilerParams(
            dimension_semantics=("parallel",),      # batch tiles are independent
            vmem_limit_bytes=32 * 1024 * 1024,      # plenty even for 16K tiles
        ),
        cost_estimate=cost,
    )(x, w1b, b1, w2b, b2, w3b, b3)

    # Module parity: [B, ndv].
    return oT.T


def init_params(key, nde, ndv):
    """Deterministic init matching nn.Linear shapes (PyTorch [out, in] layout)."""
    h1 = (ndv + nde) // 3
    h2 = 2 * (ndv + nde) // 3
    keys = jax.random.split(key, 6)

    def linear(kw, kb, fan_in, fan_out):
        bound = 1.0 / (fan_in ** 0.5)
        w = jax.random.uniform(kw, (fan_out, fan_in), jnp.float32, -bound, bound)
        b = jax.random.uniform(kb, (fan_out, 1), jnp.float32, -bound, bound)
        return w, b

    w1, b1 = linear(keys[0], keys[1], nde, h1)
    w2, b2 = linear(keys[2], keys[3], h1, h2)
    w3, b3 = linear(keys[4], keys[5], h2, ndv)
    return {"w1": w1, "b1": b1, "w2": w2, "b2": b2, "w3": w3, "b3": b3}


def reference_forward(x, p):
    def swish(v):
        return v * jax.nn.sigmoid(v)
    h = swish(x @ p["w1"].T + p["b1"].T)
    h = swish(h @ p["w2"].T + p["b2"].T)
    return h @ p["w3"].T + p["b3"].T


if __name__ == "__main__":
    nde, ndv = 32, 16          # -> h1 = 16, h2 = 32
    B = 300                    # not a multiple of 128 -> exercises partial blocks

    key = jax.random.PRNGKey(0)
    k_x, k_p = jax.random.split(key)
    x = jax.random.normal(k_x, (B, nde), jnp.float32)
    params = init_params(k_p, nde, ndv)

    # Default batch_tile=8192 gets capped to 256 here (>= 2 grid steps), so this
    # small test still exercises pipelining, weight residency, and the
    # partial-last-block path.
    out = value_decoder_forward(x, params)
    out = jax.block_until_ready(out)

    ref = reference_forward(x, params)
    assert out.shape == (B, ndv)
    # bf16 MXU operands with f32 accumulation -> relaxed tolerance vs f32 ref.
    assert jnp.allclose(out, ref, atol=2e-2, rtol=2e-2), "mismatch vs reference"

    print("KERNEL_OK")
</pallas_src>

<mosaic_0001>
module attributes {stable_mosaic.version = 11 : i64} {
  func.func @value_decoder_kernel(%arg0: i32, %arg1: memref<256x32xf32, #tpu.memory_space<vmem>>, %arg2: memref<16x32xbf16, #tpu.memory_space<vmem>>, %arg3: memref<16x1xf32, #tpu.memory_space<vmem>>, %arg4: memref<32x16xbf16, #tpu.memory_space<vmem>>, %arg5: memref<32x1xf32, #tpu.memory_space<vmem>>, %arg6: memref<16x32xbf16, #tpu.memory_space<vmem>>, %arg7: memref<16x1xf32, #tpu.memory_space<vmem>>, %arg8: memref<16x256xf32, #tpu.memory_space<vmem>>) attributes {dimension_semantics = [#tpu.dimension_semantics<parallel>], iteration_bounds = array<i64: 2>, scalar_prefetch = 0 : i64, scratch_operands = 0 : i64, tpu.core_type = #tpu.core_type<tc>, window_params = [{transform_indices = @transform_0, window_bounds = array<i64: 256, 32>}, {pipeline_mode = #tpu.pipeline_mode<synchronous>, transform_indices = @transform_1, window_bounds = array<i64: 16, 32>}, {pipeline_mode = #tpu.pipeline_mode<synchronous>, transform_indices = @transform_2, window_bounds = array<i64: 16, 1>}, {pipeline_mode = #tpu.pipeline_mode<synchronous>, transform_indices = @transform_3, window_bounds = array<i64: 32, 16>}, {pipeline_mode = #tpu.pipeline_mode<synchronous>, transform_indices = @transform_4, window_bounds = array<i64: 32, 1>}, {pipeline_mode = #tpu.pipeline_mode<synchronous>, transform_indices = @transform_5, window_bounds = array<i64: 16, 32>}, {pipeline_mode = #tpu.pipeline_mode<synchronous>, transform_indices = @transform_6, window_bounds = array<i64: 16, 1>}, {transform_indices = @transform_7, window_bounds = array<i64: 16, 256>}]} {
    %c0 = arith.constant 0 : index
    %c0_0 = arith.constant 0 : index
    %0 = vector.load %arg1[%c0, %c0_0] : memref<256x32xf32, #tpu.memory_space<vmem>>, vector<256x32xf32>
    %1 = arith.truncf %0 : vector<256x32xf32> to vector<256x32xbf16>
    %c0_1 = arith.constant 0 : index
    %c0_2 = arith.constant 0 : index
    %2 = vector.load %arg2[%c0_1, %c0_2] : memref<16x32xbf16, #tpu.memory_space<vmem>>, vector<16x32xbf16>
    %cst = arith.constant dense<0.000000e+00> : vector<16x256xf32>
    %3 = tpu.matmul %2, %1, %cst {dimension_numbers = #tpu.dot_dimension_numbers<[1], [1], [0], [0], [0, 0, 1, 0], [], []>} : vector<16x32xbf16>, vector<256x32xbf16>, vector<16x256xf32> -> vector<16x256xf32>
    %c0_3 = arith.constant 0 : index
    %c0_4 = arith.constant 0 : index
    %4 = vector.load %arg3[%c0_3, %c0_4] : memref<16x1xf32, #tpu.memory_space<vmem>>, vector<16x1xf32>
    %5 = vector.broadcast %4 : vector<16x1xf32> to vector<16x256xf32>
    %6 = arith.addf %3, %5 : vector<16x256xf32>
    %cst_5 = arith.constant 5.000000e-01 : f32
    %7 = vector.broadcast %cst_5 : f32 to vector<16x256xf32>
    %8 = arith.mulf %7, %6 : vector<16x256xf32>
    %cst_6 = arith.constant 5.000000e-01 : f32
    %9 = vector.broadcast %cst_6 : f32 to vector<16x256xf32>
    %10 = arith.mulf %9, %6 : vector<16x256xf32>
    %11 = math.tanh %10 : vector<16x256xf32>
    %cst_7 = arith.constant 1.000000e+00 : f32
    %12 = vector.broadcast %cst_7 : f32 to vector<16x256xf32>
    %13 = arith.addf %12, %11 : vector<16x256xf32>
    %14 = arith.mulf %8, %13 : vector<16x256xf32>
    %c0_8 = arith.constant 0 : index
    %c0_9 = arith.constant 0 : index
    %15 = vector.load %arg4[%c0_8, %c0_9] : memref<32x16xbf16, #tpu.memory_space<vmem>>, vector<32x16xbf16>
    %16 = arith.truncf %14 : vector<16x256xf32> to vector<16x256xbf16>
    %cst_10 = arith.constant dense<0.000000e+00> : vector<32x256xf32>
    %17 = tpu.matmul %15, %16, %cst_10 {dimension_numbers = #tpu.dot_dimension_numbers<[1], [0], [0], [1], [0, 0, 1, 1], [], []>} : vector<32x16xbf16>, vector<16x256xbf16>, vector<32x256xf32> -> vector<32x256xf32>
    %c0_11 = arith.constant 0 : index
    %c0_12 = arith.constant 0 : index
    %18 = vector.load %arg5[%c0_11, %c0_12] : memref<32x1xf32, #tpu.memory_space<vmem>>, vector<32x1xf32>
    %19 = vector.broadcast %18 : vector<32x1xf32> to vector<32x256xf32>
    %20 = arith.addf %17, %19 : vector<32x256xf32>
    %cst_13 = arith.constant 5.000000e-01 : f32
    %21 = vector.broadcast %cst_13 : f32 to vector<32x256xf32>
    %22 = arith.mulf %21, %20 : vector<32x256xf32>
    %cst_14 = arith.constant 5.000000e-01 : f32
    %23 = vector.broadcast %cst_14 : f32 to vector<32x256xf32>
    %24 = arith.mulf %23, %20 : vector<32x256xf32>
    %25 = math.tanh %24 : vector<32x256xf32>
    %cst_15 = arith.constant 1.000000e+00 : f32
    %26 = vector.broadcast %cst_15 : f32 to vector<32x256xf32>
    %27 = arith.addf %26, %25 : vector<32x256xf32>
    %28 = arith.mulf %22, %27 : vector<32x256xf32>
    %c0_16 = arith.constant 0 : index
    %c0_17 = arith.constant 0 : index
    %29 = vector.load %arg6[%c0_16, %c0_17] : memref<16x32xbf16, #tpu.memory_space<vmem>>, vector<16x32xbf16>
    %30 = arith.truncf %28 : vector<32x256xf32> to vector<32x256xbf16>
    %cst_18 = arith.constant dense<0.000000e+00> : vector<16x256xf32>
    %31 = tpu.matmul %29, %30, %cst_18 {dimension_numbers = #tpu.dot_dimension_numbers<[1], [0], [0], [1], [0, 0, 1, 1], [], []>} : vector<16x32xbf16>, vector<32x256xbf16>, vector<16x256xf32> -> vector<16x256xf32>
    %c0_19 = arith.constant 0 : index
    %c0_20 = arith.constant 0 : index
    %32 = vector.load %arg7[%c0_19, %c0_20] : memref<16x1xf32, #tpu.memory_space<vmem>>, vector<16x1xf32>
    %33 = vector.broadcast %32 : vector<16x1xf32> to vector<16x256xf32>
    %34 = arith.addf %31, %33 : vector<16x256xf32>
    %c0_21 = arith.constant 0 : index
    %c0_22 = arith.constant 0 : index
    %35 = vector.load %arg8[%c0_21, %c0_22] : memref<16x256xf32, #tpu.memory_space<vmem>>, vector<16x256xf32>
    tpu.vector_store %arg8[%c0_21, %c0_22], %34 {strides = array<i32>} : memref<16x256xf32, #tpu.memory_space<vmem>>, vector<16x256xf32>,
    return
  }
  func.func @transform_0(%arg0: i32) -> (i32, i32) {
    %c0_i32 = arith.constant 0 : i32
    %c0_i32_0 = arith.constant 0 : i32
    return %arg0, %c0_i32 : i32, i32
  }
  func.func @transform_1(%arg0: i32) -> (i32, i32) {
    %c0_i32 = arith.constant 0 : i32
    %c0_i32_0 = arith.constant 0 : i32
    %c0_i32_1 = arith.constant 0 : i32
    return %c0_i32, %c0_i32_0 : i32, i32
  }
  func.func @transform_2(%arg0: i32) -> (i32, i32) {
    %c0_i32 = arith.constant 0 : i32
    %c0_i32_0 = arith.constant 0 : i32
    %c0_i32_1 = arith.constant 0 : i32
    return %c0_i32, %c0_i32_0 : i32, i32
  }
  func.func @transform_3(%arg0: i32) -> (i32, i32) {
    %c0_i32 = arith.constant 0 : i32
    %c0_i32_0 = arith.constant 0 : i32
    %c0_i32_1 = arith.constant 0 : i32
    return %c0_i32, %c0_i32_0 : i32, i32
  }
  func.func @transform_4(%arg0: i32) -> (i32, i32) {
    %c0_i32 = arith.constant 0 : i32
    %c0_i32_0 = arith.constant 0 : i32
    %c0_i32_1 = arith.constant 0 : i32
    return %c0_i32, %c0_i32_0 : i32, i32
  }
  func.func @transform_5(%arg0: i32) -> (i32, i32) {
    %c0_i32 = arith.constant 0 : i32
    %c0_i32_0 = arith.constant 0 : i32
    %c0_i32_1 = arith.constant 0 : i32
    return %c0_i32, %c0_i32_0 : i32, i32
  }
  func.func @transform_6(%arg0: i32) -> (i32, i32) {
    %c0_i32 = arith.constant 0 : i32
    %c0_i32_0 = arith.constant 0 : i32
    %c0_i32_1 = arith.constant 0 : i32
    return %c0_i32, %c0_i32_0 : i32, i32
  }
  func.func @transform_7(%arg0: i32) -> (i32, i32) {
    %c0_i32 = arith.constant 0 : i32
    %c0_i32_0 = arith.constant 0 : i32
    return %c0_i32, %arg0 : i32, i32
  }
}

</mosaic_0001>

<llo_original>
// kernel: tpu_custom_call.1
$region0: #{tpu_custom_call.1}
  #allocation0 [shape = 'u32[]', space=smem, size = 0x4, offset = 0x4, fixed_abs, tag = 'smem constant byte address 0x4 - core index']
  #allocation1 [shape = 'u32[144,128]{1,0:T(1,128)}', space=vmem, size = 0x12000, scoped, tag = 'internal scratch']
  %s0 = inlined_call_operand.vmem [shape: f32[300,32], index: 0, kind: input, shape index: {}]
  %s1 = inlined_call_operand.vmem [shape: bf16[16,32], index: 1, kind: input, shape index: {}]
  %s2 = inlined_call_operand.vmem [shape: f32[16,1], index: 2, kind: input, shape index: {}]
  %s3 = inlined_call_operand.vmem [shape: bf16[32,16], index: 3, kind: input, shape index: {}]
  %s4 = inlined_call_operand.vmem [shape: f32[32,1], index: 4, kind: input, shape index: {}]
  %s5 = inlined_call_operand.vmem [shape: bf16[16,32], index: 5, kind: input, shape index: {}]
  %s6 = inlined_call_operand.vmem [shape: f32[16,1], index: 6, kind: input, shape index: {}]
  %s7 = inlined_call_operand.hbm [shape: f32[16,300], index: 7, kind: output, shape index: {}]
  %s8 = sld [smem:[#allocation0]]
  $region61: #{tpu_custom_call.1} parent=0
    _
  %s10 = ssub.s32 1, %s8
  %s11 = scalar_select 0, %s10, %s8
  $region1: #{tpu_custom_call.1} parent=0
    #allocation2 [shape = 'u8[32768]{0}', space=vmem, size = 0x8000, scoped, tag = 'output window, operand 0']
    #allocation3 [shape = 's32[2]{0}', space=sflag, size = 0x8, scoped, tag = 'scoped memory for tpu_custom_call.1']
    %12 = vsyncpa [#allocation3], 0
    %s13 = scalar_lea.sflag [#allocation3], 1
    %14 = vsyncpa %s13, 0
    loop: start=0, step=1, limit=4
    $region2: #{tpu_custom_call.1} parent=1 // loop_pre_header
      _
    $region3: #{tpu_custom_call.1} parent=1 // loop_header
      %s16 = sphi 0, %s20
      %p17 = scmp.ge.s32.totalorder %s16, 4
      %s26 = sphi 0, %s28
      %s29 = sphi 0, %s26
      %s30 = sphi 0, %s29
      %s46 = sphi 0, %s30
      %s50 = sphi 0, %s50
      %s52 = sphi 0, %s50
      %s53 = sphi 0, %s52
      %s67 = sphi 0, %s53
      %s71 = sphi 0, %s71
      %s73 = sphi 0, %s71
      %s74 = sphi 0, %s73
      %s88 = sphi 0, %s74
      %s92 = sphi 0, %s92
      %s94 = sphi 0, %s92
      %s95 = sphi 0, %s94
      %s109 = sphi 0, %s95
      %s113 = sphi 0, %s113
      %s115 = sphi 0, %s113
      %s116 = sphi 0, %s115
      %s130 = sphi 0, %s116
      %s134 = sphi 0, %s134
      %s136 = sphi 0, %s134
      %s137 = sphi 0, %s136
      %s151 = sphi 0, %s137
      %s155 = sphi 0, %s155
      %s157 = sphi 0, %s155
      %s158 = sphi 0, %s157
      %s172 = sphi 0, %s158
      %s178 = sphi 0, %s180
      %s181 = sphi 0, %s178
      %s182 = sphi 0, %s181
      %s198 = sphi 0, %s182
    $region4: #{tpu_custom_call.1} parent=1 // loop_header_branch
      %19 = sbr.rel (%p17) target = $region8
    $region5: #{tpu_custom_call.1} parent=1 // loop_body
      %s21 = ssub.s32 %s16, 1
      %s22 = ssub.s32 %s16, 2
      %s23 = sadd.s32 %s16, 1
      %s24 = ssub.s32 %s16, %s23
      %p25 = scmp.eq.s32.totalorder %s24, 0
      %s27 = sadd.s32 %s26, 1
      %s28 = scalar_select %p25, %s26, %s27
      %p31 = pneg %p25
      %p32 = scmp.eq.s32.totalorder %s16, 1
      %p33 = por %p31, %p32
      %p34 = scmp.ne.s32.totalorder %s26, %s29
      %p35 = scmp.eq.s32.totalorder %s16, 0
      %p36 = por %p34, %p35
      %p37 = scmp.ne.s32.totalorder %s26, %s29
      %p38 = scmp.eq.s32.totalorder %s21, 1
      %p39 = por %p37, %p38
      %p40 = scmp.ne.s32.totalorder %s29, %s30
      %p41 = scmp.eq.s32.totalorder %s21, 0
      %p42 = por %p40, %p41
      %p43 = scmp.ne.s32.totalorder %s29, %s30
      %p44 = scmp.eq.s32.totalorder %s22, 1
      %p45 = por %p43, %p44
      %p47 = scmp.ne.s32.totalorder %s30, %s46
      %p48 = scmp.eq.s32.totalorder %s22, 0
      %p49 = por %p47, %p48
      %s51 = sadd.s32 %s50, 1
      %p54 = scmp.eq.s32.totalorder %s16, 1
      %p55 = scmp.ne.s32.totalorder %s50, %s52
      %p56 = scmp.eq.s32.totalorder %s16, 0
      %p57 = por %p55, %p56
      %p58 = scmp.ne.s32.totalorder %s50, %s52
      %p59 = scmp.eq.s32.totalorder %s21, 1
      %p60 = por %p58, %p59
      %p61 = scmp.ne.s32.totalorder %s52, %s53
      %p62 = scmp.eq.s32.totalorder %s21, 0
      %p63 = por %p61, %p62
      %p64 = scmp.ne.s32.totalorder %s52, %s53
      %p65 = scmp.eq.s32.totalorder %s22, 1
      %p66 = por %p64, %p65
      %p68 = scmp.ne.s32.totalorder %s53, %s67
      %p69 = scmp.eq.s32.totalorder %s22, 0
      %p70 = por %p68, %p69
      %s72 = sadd.s32 %s71, 1
      %p75 = scmp.eq.s32.totalorder %s16, 1
      %p76 = scmp.ne.s32.totalorder %s71, %s73
      %p77 = scmp.eq.s32.totalorder %s16, 0
      %p78 = por %p76, %p77
      %p79 = scmp.ne.s32.totalorder %s71, %s73
      %p80 = scmp.eq.s32.totalorder %s21, 1
      %p81 = por %p79, %p80
      %p82 = scmp.ne.s32.totalorder %s73, %s74
      %p83 = scmp.eq.s32.totalorder %s21, 0
      %p84 = por %p82, %p83
      %p85 = scmp.ne.s32.totalorder %s73, %s74
      %p86 = scmp.eq.s32.totalorder %s22, 1
      %p87 = por %p85, %p86
      %p89 = scmp.ne.s32.totalorder %s74, %s88
      %p90 = scmp.eq.s32.totalorder %s22, 0
      %p91 = por %p89, %p90
      %s93 = sadd.s32 %s92, 1
      %p96 = scmp.eq.s32.totalorder %s16, 1
      %p97 = scmp.ne.s32.totalorder %s92, %s94
      %p98 = scmp.eq.s32.totalorder %s16, 0
      %p99 = por %p97, %p98
      %p100 = scmp.ne.s32.totalorder %s92, %s94
      %p101 = scmp.eq.s32.totalorder %s21, 1
      %p102 = por %p100, %p101
      %p103 = scmp.ne.s32.totalorder %s94, %s95
      %p104 = scmp.eq.s32.totalorder %s21, 0
      %p105 = por %p103, %p104
      %p106 = scmp.ne.s32.totalorder %s94, %s95
      %p107 = scmp.eq.s32.totalorder %s22, 1
      %p108 = por %p106, %p107
      %p110 = scmp.ne.s32.totalorder %s95, %s109
      %p111 = scmp.eq.s32.totalorder %s22, 0
      %p112 = por %p110, %p111
      %s114 = sadd.s32 %s113, 1
      %p117 = scmp.eq.s32.totalorder %s16, 1
      %p118 = scmp.ne.s32.totalorder %s113, %s115
      %p119 = scmp.eq.s32.totalorder %s16, 0
      %p120 = por %p118, %p119
      %p121 = scmp.ne.s32.totalorder %s113, %s115
      %p122 = scmp.eq.s32.totalorder %s21, 1
      %p123 = por %p121, %p122
      %p124 = scmp.ne.s32.totalorder %s115, %s116
      %p125 = scmp.eq.s32.totalorder %s21, 0
      %p126 = por %p124, %p125
      %p127 = scmp.ne.s32.totalorder %s115, %s116
      %p128 = scmp.eq.s32.totalorder %s22, 1
      %p129 = por %p127, %p128
      %p131 = scmp.ne.s32.totalorder %s116, %s130
      %p132 = scmp.eq.s32.totalorder %s22, 0
      %p133 = por %p131, %p132
      %s135 = sadd.s32 %s134, 1
      %p138 = scmp.eq.s32.totalorder %s16, 1
      %p139 = scmp.ne.s32.totalorder %s134, %s136
      %p140 = scmp.eq.s32.totalorder %s16, 0
      %p141 = por %p139, %p140
      %p142 = scmp.ne.s32.totalorder %s134, %s136
      %p143 = scmp.eq.s32.totalorder %s21, 1
      %p144 = por %p142, %p143
      %p145 = scmp.ne.s32.totalorder %s136, %s137
      %p146 = scmp.eq.s32.totalorder %s21, 0
      %p147 = por %p145, %p146
      %p148 = scmp.ne.s32.totalorder %s136, %s137
      %p149 = scmp.eq.s32.totalorder %s22, 1
      %p150 = por %p148, %p149
      %p152 = scmp.ne.s32.totalorder %s137, %s151
      %p153 = scmp.eq.s32.totalorder %s22, 0
      %p154 = por %p152, %p153
      %s156 = sadd.s32 %s155, 1
      %p159 = scmp.eq.s32.totalorder %s16, 1
      %p160 = scmp.ne.s32.totalorder %s155, %s157
      %p161 = scmp.eq.s32.totalorder %s16, 0
      %p162 = por %p160, %p161
      %p163 = scmp.ne.s32.totalorder %s155, %s157
      %p164 = scmp.eq.s32.totalorder %s21, 1
      %p165 = por %p163, %p164
      %p166 = scmp.ne.s32.totalorder %s157, %s158
      %p167 = scmp.eq.s32.totalorder %s21, 0
      %p168 = por %p166, %p167
      %p169 = scmp.ne.s32.totalorder %s157, %s158
      %p170 = scmp.eq.s32.totalorder %s22, 1
      %p171 = por %p169, %p170
      %p173 = scmp.ne.s32.totalorder %s158, %s172
      %p174 = scmp.eq.s32.totalorder %s22, 0
      %p175 = por %p173, %p174
      %s176 = ssub.s32 %s16, %s23
      %p177 = scmp.eq.s32.totalorder %s176, 0
      %s179 = sadd.s32 %s178, 1
      %s180 = scalar_select %p177, %s178, %s179
      %p183 = pneg %p177
      %p184 = scmp.eq.s32.totalorder %s16, 1
      %p185 = por %p183, %p184
      %p186 = scmp.ne.s32.totalorder %s178, %s181
      %p187 = scmp.eq.s32.totalorder %s16, 0
      %p188 = por %p186, %p187
      %p189 = scmp.ne.s32.totalorder %s178, %s181
      %p190 = scmp.eq.s32.totalorder %s21, 1
      %p191 = por %p189, %p190
      %p192 = scmp.ne.s32.totalorder %s181, %s182
      %p193 = scmp.eq.s32.totalorder %s21, 0
      %p194 = por %p192, %p193
      %p195 = scmp.ne.s32.totalorder %s181, %s182
      %p196 = scmp.eq.s32.totalorder %s22, 1
      %p197 = por %p195, %p196
      %p199 = scmp.ne.s32.totalorder %s182, %s198
      %p200 = scmp.eq.s32.totalorder %s22, 0
      %p201 = por %p199, %p200
      %p202 = scmp.le.s32.totalorder 1, %s16
      %p203 = scmp.lt.s32.totalorder %s16, 3
      %p204 = pnand %p202, %p203
      %p205 = pneg %p204
      // Predicated region
      $region9: #{tpu_custom_call.1} parent=5 // pred_check
        _
      $region10: #{tpu_custom_call.1} parent=5 // pred_check_branch
        %207 = sbr.rel (%p204) target = $region12
      $region11: #{tpu_custom_call.1} parent=5 // pred_region
        %s208 = ssub.s32 %s16, 1
        // Predicated region
        $region13: #{tpu_custom_call.1} parent=11 // pred_check
          %p209 = pneg %p63
        $region14: #{tpu_custom_call.1} parent=11 // pred_check_branch
          %211 = sbr.rel (%p209) target = $region16
        $region15: #{tpu_custom_call.1} parent=11 // pred_region
          _
        $region16: #{tpu_custom_call.1} parent=11 // pred_fallthru
          _
        // Predicated region
        $region17: #{tpu_custom_call.1} parent=11 // pred_check
          %p212 = pneg %p84
        $region18: #{tpu_custom_call.1} parent=11 // pred_check_branch
          %214 = sbr.rel (%p212) target = $region20
        $region19: #{tpu_custom_call.1} parent=11 // pred_region
          _
        $region20: #{tpu_custom_call.1} parent=11 // pred_fallthru
          _
        // Predicated region
        $region21: #{tpu_custom_call.1} parent=11 // pred_check
          %p215 = pneg %p105
        $region22: #{tpu_custom_call.1} parent=11 // pred_check_branch
          %217 = sbr.rel (%p215) target = $region24
        $region23: #{tpu_custom_call.1} parent=11 // pred_region
          _
        $region24: #{tpu_custom_call.1} parent=11 // pred_fallthru
          _
        // Predicated region
        $region25: #{tpu_custom_call.1} parent=11 // pred_check
          %p218 = pneg %p126
        $region26: #{tpu_custom_call.1} parent=11 // pred_check_branch
          %220 = sbr.rel (%p218) target = $region28
        $region27: #{tpu_custom_call.1} parent=11 // pred_region
          _
        $region28: #{tpu_custom_call.1} parent=11 // pred_fallthru
          _
        // Predicated region
        $region29: #{tpu_custom_call.1} parent=11 // pred_check
          %p221 = pneg %p147
        $region30: #{tpu_custom_call.1} parent=11 // pred_check_branch
          %223 = sbr.rel (%p221) target = $region32
        $region31: #{tpu_custom_call.1} parent=11 // pred_region
          _
        $region32: #{tpu_custom_call.1} parent=11 // pred_fallthru
          _
        // Predicated region
        $region33: #{tpu_custom_call.1} parent=11 // pred_check
          %p224 = pneg %p168
        $region34: #{tpu_custom_call.1} parent=11 // pred_check_branch
          %226 = sbr.rel (%p224) target = $region36
        $region35: #{tpu_custom_call.1} parent=11 // pred_region
          _
        $region36: #{tpu_custom_call.1} parent=11 // pred_fallthru
          _
      $region12: #{tpu_custom_call.1} parent=5 // pred_fallthru
        _
      %p227 = scmp.lt.s32.totalorder %s16, 2
      // Predicated region
      $region37: #{tpu_custom_call.1} parent=5 // pred_check
        %p228 = pneg %p227
      $region38: #{tpu_custom_call.1} parent=5 // pred_check_branch
        %230 = sbr.rel (%p228) target = $region40
      $region39: #{tpu_custom_call.1} parent=5 // pred_region
        // Predicated region
        $region41: #{tpu_custom_call.1} parent=39 // pred_check
          %p231 = pneg %p36
        $region42: #{tpu_custom_call.1} parent=39 // pred_check_branch
          %233 = sbr.rel (%p231) target = $region44
        $region43: #{tpu_custom_call.1} parent=39 // pred_region
          %s234 = smul.u32 32, %s16
          %s235 = ssub.s32 38, %s234
          %p236 = scmp.lt.s32.totalorder %s235, 32
          %s237 = scalar_select %p236, %s235, 32
          %s238 = smul.u32 128, %s237
          %p239 = scmp.lt.s32.totalorder %s234, 37
          %s240 = scalar_select %p239, %s234, 37
          %s241 = smul.addr %s240, 8
          %s242 = scalar_lea.vmem %s0, %s241
          %s243 = smul.u32 32, %s16
          %s244 = ssub.s32 38, %s243
          %p245 = scmp.lt.s32.totalorder %s244, 32
          %s246 = scalar_select %p245, %s244, 32
          %s247 = smul.u32 128, %s246
        $region44: #{tpu_custom_call.1} parent=39 // pred_fallthru
          _
      $region40: #{tpu_custom_call.1} parent=5 // pred_fallthru
        _
      %p248 = scmp.le.s32.totalorder 1, %s16
      %p249 = scmp.lt.s32.totalorder %s16, 3
      %p250 = pnand %p248, %p249
      %p251 = pneg %p250
      // Predicated region
      $region45: #{tpu_custom_call.1} parent=5 // pred_check
        _
      $region46: #{tpu_custom_call.1} parent=5 // pred_check_branch
        %253 = sbr.rel (%p250) target = $region48
      $region47: #{tpu_custom_call.1} parent=5 // pred_region
        %s254 = ssub.s32 %s16, 1
        %s255 = smul.u32 32, %s21
        %s256 = ssub.s32 38, %s255
        %p257 = scmp.lt.s32.totalorder %s256, 32
        %s258 = scalar_select %p257, %s256, 32
        %s259 = smul.u32 128, %s258
        %p260 = scmp.lt.s32.totalorder %s255, 37
        %s261 = scalar_select %p260, %s255, 37
        %s262 = smul.addr %s261, 8
        %s263 = scalar_lea.vmem %s0, %s262
        %p264 = pneg %p42
        %p265 = pneg %p39
        %p266 = pneg %p63
        %p267 = pneg %p60
        %p268 = pneg %p84
        %p269 = pneg %p81
        %p270 = pneg %p105
        %p271 = pneg %p102
        %p272 = pneg %p126
        %p273 = pneg %p123
        %p274 = pneg %p147
        %p275 = pneg %p144
        %p276 = pneg %p168
        %p277 = pneg %p165
        %p278 = pneg %p194
        %p279 = pneg %p191
        %s280 = sand.u32 %s181, 1
        %s281 = scalar_lea.sflag [#allocation3], %s280
        %s282 = sand.u32 %s181, 1
        %s283 = smul.addr %s282, 32
        %s284 = scalar_lea.vmem [#allocation2], %s283
        %s285 = smul.u32 32, %s21
        %s286 = ssub.s32 38, %s285
        %p287 = scmp.lt.s32.totalorder %s286, 32
        %s288 = scalar_select %p287, %s286, 32
        %s289 = smul.u32 128, %s288
        %p290 = scmp.lt.s32.totalorder %s285, 37
        %s291 = scalar_select %p290, %s285, 37
        %s292 = smul.addr %s291, 8
        %s293 = scalar_lea.vmem %s0, %s292
        %s294 = smul.u32 32, %s21
        %s295 = ssub.s32 38, %s294
        %p296 = scmp.lt.s32.totalorder %s295, 32
        %s297 = scalar_select %p296, %s295, 32
        %s298 = smul.u32 128, %s297
        %s299 = smul.u32 2, %s21
        %s300 = ssub.s32 3, %s299
        %p301 = scmp.lt.s32.totalorder %s300, 2
        %s302 = scalar_select %p301, %s300, 2
        %s303 = smul.u32 256, %s302
        %v305 = vld [vmem:[%s293] sm:$0xff]
        %v306 = vld [vmem:[%s293 + $0x8] sm:$0xff]
        %v307 = vld [vmem:[%s293 + $0x10] sm:$0xff]
        %v308 = vld [vmem:[%s293 + $0x18] sm:$0xff]
        %v309 = vld [vmem:[%s293 + $0x20] sm:$0xff]
        %v310 = vld [vmem:[%s293 + $0x28] sm:$0xff]
        %v311 = vld [vmem:[%s293 + $0x30] sm:$0xff]
        %v312 = vld [vmem:[%s293 + $0x38] sm:$0xff]
        %v313 = vld [vmem:[%s293 + $0x40] sm:$0xff]
        %v314 = vld [vmem:[%s293 + $0x48] sm:$0xff]
        %v315 = vld [vmem:[%s293 + $0x50] sm:$0xff]
        %v316 = vld [vmem:[%s293 + $0x58] sm:$0xff]
        %v317 = vld [vmem:[%s293 + $0x60] sm:$0xff]
        %v318 = vld [vmem:[%s293 + $0x68] sm:$0xff]
        %v319 = vld [vmem:[%s293 + $0x70] sm:$0xff]
        %v320 = vld [vmem:[%s293 + $0x78] sm:$0xff]
        %v321 = vld [vmem:[%s293 + $0x80] sm:$0xff]
        %v322 = vld [vmem:[%s293 + $0x88] sm:$0xff]
        %v323 = vld [vmem:[%s293 + $0x90] sm:$0xff]
        %v324 = vld [vmem:[%s293 + $0x98] sm:$0xff]
        %v325 = vld [vmem:[%s293 + $0xa0] sm:$0xff]
        %v326 = vld [vmem:[%s293 + $0xa8] sm:$0xff]
        %v327 = vld [vmem:[%s293 + $0xb0] sm:$0xff]
        %v328 = vld [vmem:[%s293 + $0xb8] sm:$0xff]
        %v329 = vld [vmem:[%s293 + $0xc0] sm:$0xff]
        %v330 = vld [vmem:[%s293 + $0xc8] sm:$0xff]
        %v331 = vld [vmem:[%s293 + $0xd0] sm:$0xff]
        %v332 = vld [vmem:[%s293 + $0xd8] sm:$0xff]
        %v333 = vld [vmem:[%s293 + $0xe0] sm:$0xff]
        %v334 = vld [vmem:[%s293 + $0xe8] sm:$0xff]
        %v335 = vld [vmem:[%s293 + $0xf0] sm:$0xff]
        %v336 = vld [vmem:[%s293 + $0xf8] sm:$0xff]
        %v337 = vpack.c.bf16 %v306, %v305
        %v338 = vpack.c.bf16 %v308, %v307
        %v339 = vpack.c.bf16 %v310, %v309
        %v340 = vpack.c.bf16 %v312, %v311
        %v341 = vpack.c.bf16 %v314, %v313
        %v342 = vpack.c.bf16 %v316, %v315
        %v343 = vpack.c.bf16 %v318, %v317
        %v344 = vpack.c.bf16 %v320, %v319
        %v345 = vpack.c.bf16 %v322, %v321
        %v346 = vpack.c.bf16 %v324, %v323
        %v347 = vpack.c.bf16 %v326, %v325
        %v348 = vpack.c.bf16 %v328, %v327
        %v349 = vpack.c.bf16 %v330, %v329
        %v350 = vpack.c.bf16 %v332, %v331
        %v351 = vpack.c.bf16 %v334, %v333
        %v352 = vpack.c.bf16 %v336, %v335
        %v353 = vld [vmem:[%s1] sm:$0xf]
        %v354 = vld [vmem:[%s1 + $0x4] sm:$0xf]
        %v355 = vld [vmem:[%s2] sm:$0xff]
        %v356 = vld [vmem:[%s2 + $0x8] sm:$0xff]
        %358 = vset.pattern.permute.xlu0 0
        %359 = vperm.xlu0 %358, %v355
        %v360 = vpop.permute.xlu0 %359
        %363 = vset.pattern.permute.xlu0 0
        %364 = vperm.xlu0 %363, %v356
        %v365 = vpop.permute.xlu0 %364
        %v369 = vunpack.c.l.b16 %v353
        %v370 = vunpack.c.l.b16 %v354
        %v371 = vpack.c.b16 %v370, %v369
        %vm372 = vcmask 261120
        %v374 = vsel %vm372, %v371, 0
        %v377 = vsel %vm372, %v337, 0
        %v380 = vsel %vm372, %v338, 0
        %v383 = vsel %vm372, %v339, 0
        %v386 = vsel %vm372, %v340, 0
        %v389 = vsel %vm372, %v341, 0
        %v392 = vsel %vm372, %v342, 0
        %v395 = vsel %vm372, %v343, 0
        %v398 = vsel %vm372, %v344, 0
        %v401 = vsel %vm372, %v345, 0
        %v404 = vsel %vm372, %v346, 0
        %v407 = vsel %vm372, %v347, 0
        %v410 = vsel %vm372, %v348, 0
        %v413 = vsel %vm372, %v349, 0
        %v416 = vsel %vm372, %v350, 0
        %v419 = vsel %vm372, %v351, 0
        %v422 = vsel %vm372, %v352, 0
        %424 = vmatprep.subr.bf16.mxu0 0
        %425 = vmatpush1.bf16.xpose.msra.mxu0 %v377
        %426 = vmatprep.subr.bf16.mxu0 0
        %427 = vmatpush1.bf16.xpose.msra.mxu0 %v380
        %428 = vmatprep.subr.bf16.mxu0 0
        %429 = vmatpush1.bf16.xpose.msra.mxu0 %v383
        %430 = vmatprep.subr.bf16.mxu0 0
        %431 = vmatpush1.bf16.xpose.msra.mxu0 %v386
        %432 = vmatprep.subr.bf16.mxu0 0
        %433 = vmatpush1.bf16.xpose.msra.mxu0 %v389
        %434 = vmatprep.subr.bf16.mxu0 0
        %435 = vmatpush1.bf16.xpose.msra.mxu0 %v392
        %436 = vmatprep.subr.bf16.mxu0 0
        %437 = vmatpush1.bf16.xpose.msra.mxu0 %v395
        %438 = vmatprep.subr.bf16.mxu0 0
        %439 = vmatpush1.bf16.xpose.msra.mxu0 %v398
        %440 = vmatprep.subr.bf16.mxu0 0
        %441 = vmatpush1.bf16.xpose.msra.mxu0 %v401
        %442 = vmatprep.subr.bf16.mxu0 0
        %443 = vmatpush1.bf16.xpose.msra.mxu0 %v404
        %444 = vmatprep.subr.bf16.mxu0 0
        %445 = vmatpush1.bf16.xpose.msra.mxu0 %v407
        %446 = vmatprep.subr.bf16.mxu0 0
        %447 = vmatpush1.bf16.xpose.msra.mxu0 %v410
        %448 = vmatprep.subr.bf16.mxu0 0
        %449 = vmatpush1.bf16.xpose.msra.mxu0 %v413
        %450 = vmatprep.subr.bf16.mxu0 0
        %451 = vmatpush1.bf16.xpose.msra.mxu0 %v416
        %452 = vmatprep.subr.bf16.mxu0 0
        %453 = vmatpush1.bf16.xpose.msra.mxu0 %v419
        %454 = vmatprep.subr.bf16.mxu0 0
        %455 = vmatpush1.bf16.xpose.msra.mxu0 %v422
        %456 = vmatprep.mubr.bf16.mxu0 0
        %457 = vmatmul.mubr.bf16.gmra.mrb[0].mxu0 %v374
        %v458 = vpop.f32.mrb[0].mxu0
        %v459 = vadd.f32 %v360, %v458
        %v460 = vpop.f32.mrb[0].mxu0
        %v461 = vadd.f32 %v360, %v460
        %v462 = vpop.f32.mrb[0].mxu0
        %v463 = vadd.f32 %v365, %v462
        %v464 = vpop.f32.mrb[0].mxu0
        %v465 = vadd.f32 %v365, %v464
        %466 = vdwg.mxu0
        %v467 = vmul.f32 %v459, 0.5
        %v468 = vmul.f32 %v461, 0.5
        %v469 = vmul.f32 %v463, 0.5
        %v470 = vmul.f32 %v465, 0.5
        %v471 = vtanh.pop %v467
        %v472 = vtanh.pop %v468
        %v473 = vtanh.pop %v469
        %v474 = vtanh.pop %v470
        %v475 = vadd.f32 %v471, 1.0
        %v476 = vadd.f32 %v472, 1.0
        %v477 = vadd.f32 %v473, 1.0
        %v478 = vadd.f32 %v474, 1.0
        %v479 = vmul.f32 %v467, %v475
        %v480 = vmul.f32 %v468, %v476
        %v481 = vmul.f32 %v469, %v477
        %v482 = vmul.f32 %v470, %v478
        %v483 = vld [vmem:[%s3] sm:$0xf]
        %v484 = vld [vmem:[%s3 + $0x4] sm:$0xf]
        %v485 = vld [vmem:[%s3 + $0x8] sm:$0xf]
        %v486 = vld [vmem:[%s3 + $0xc] sm:$0xf]
        %v487 = vpack.c.bf16 %v481, %v479
        %v488 = vpack.c.bf16 %v482, %v480
        %v489 = vld [vmem:[%s4] sm:$0xff]
        %v490 = vld [vmem:[%s4 + $0x8] sm:$0xff]
        %v491 = vld [vmem:[%s4 + $0x10] sm:$0xff]
        %v492 = vld [vmem:[%s4 + $0x18] sm:$0xff]
        %494 = vset.pattern.permute.xlu0 0
        %495 = vperm.xlu0 %494, %v489
        %v496 = vpop.permute.xlu0 %495
        %499 = vset.pattern.permute.xlu0 0
        %500 = vperm.xlu0 %499, %v490
        %v501 = vpop.permute.xlu0 %500
        %504 = vset.pattern.permute.xlu0 0
        %505 = vperm.xlu0 %504, %v491
        %v506 = vpop.permute.xlu0 %505
        %509 = vset.pattern.permute.xlu0 0
        %510 = vperm.xlu0 %509, %v492
        %v511 = vpop.permute.xlu0 %510
        %v517 = vunpack.c.l.b16 %v483
        %v518 = vunpack.c.l.b16 %v484
        %v519 = vunpack.c.l.b16 %v485
        %v520 = vunpack.c.l.b16 %v486
        %v521 = vpack.c.b16 %v518, %v517
        %v522 = vpack.c.b16 %v520, %v519
        %vm523 = vcmask 130048
        %v525 = vsel %vm523, %v521, 0
        %v528 = vsel %vm523, %v522, 0
        %530 = vmatprep.subr.bf16.mxu0 %v488
        %531 = vmatpush1.bf16.msra.mxu0 %v487
        %532 = vmatprep.subr.bf16.mxu0 0
        %533 = vmatpush1.bf16.msra.mxu0 0
        %534 = vmatprep.subr.bf16.mxu0 0
        %535 = vmatpush1.bf16.msra.mxu0 0
        %536 = vmatprep.subr.bf16.mxu0 0
        %537 = vmatpush1.bf16.msra.mxu0 0
        %538 = vmatprep.subr.bf16.mxu0 0
        %539 = vmatpush1.bf16.msra.mxu0 0
        %540 = vmatprep.subr.bf16.mxu0 0
        %541 = vmatpush1.bf16.msra.mxu0 0
        %542 = vmatprep.subr.bf16.mxu0 0
        %543 = vmatpush1.bf16.msra.mxu0 0
        %544 = vmatprep.subr.bf16.mxu0 0
        %545 = vmatpush1.bf16.msra.mxu0 0
        %546 = vmatprep.subr.bf16.mxu0 0
        %547 = vmatpush1.bf16.msra.mxu0 0
        %548 = vmatprep.subr.bf16.mxu0 0
        %549 = vmatpush1.bf16.msra.mxu0 0
        %550 = vmatprep.subr.bf16.mxu0 0
        %551 = vmatpush1.bf16.msra.mxu0 0
        %552 = vmatprep.subr.bf16.mxu0 0
        %553 = vmatpush1.bf16.msra.mxu0 0
        %554 = vmatprep.subr.bf16.mxu0 0
        %555 = vmatpush1.bf16.msra.mxu0 0
        %556 = vmatprep.subr.bf16.mxu0 0
        %557 = vmatpush1.bf16.msra.mxu0 0
        %558 = vmatprep.subr.bf16.mxu0 0
        %559 = vmatpush1.bf16.msra.mxu0 0
        %560 = vmatprep.subr.bf16.mxu0 0
        %561 = vmatpush1.bf16.msra.mxu0 0
        %562 = vmatprep.mubr.bf16.mxu0 0
        %563 = vmatmul.mubr.bf16.gmra.mrb[0].mxu0 %v525
        %v564 = vpop.f32.mrb[0].mxu0
        %v565 = vadd.f32 %v496, %v564
        %v566 = vpop.f32.mrb[0].mxu0
        %v567 = vadd.f32 %v496, %v566
        %v568 = vpop.f32.mrb[0].mxu0
        %v569 = vadd.f32 %v501, %v568
        %v570 = vpop.f32.mrb[0].mxu0
        %v571 = vadd.f32 %v501, %v570
        %572 = vmatprep.mubr.bf16.mxu0 0
        %573 = vmatmul.mubr.bf16.gmra.mrb[0].mxu0 %v528
        %v574 = vpop.f32.mrb[0].mxu0
        %v575 = vadd.f32 %v506, %v574
        %v576 = vpop.f32.mrb[0].mxu0
        %v577 = vadd.f32 %v506, %v576
        %v578 = vpop.f32.mrb[0].mxu0
        %v579 = vadd.f32 %v511, %v578
        %v580 = vpop.f32.mrb[0].mxu0
        %v581 = vadd.f32 %v511, %v580
        %582 = vdwg.mxu0
        %v583 = vmul.f32 %v565, 0.5
        %v584 = vmul.f32 %v567, 0.5
        %v585 = vmul.f32 %v569, 0.5
        %v586 = vmul.f32 %v571, 0.5
        %v587 = vmul.f32 %v575, 0.5
        %v588 = vmul.f32 %v577, 0.5
        %v589 = vmul.f32 %v579, 0.5
        %v590 = vmul.f32 %v581, 0.5
        %v591 = vtanh.pop %v583
        %v592 = vtanh.pop %v584
        %v593 = vtanh.pop %v585
        %v594 = vtanh.pop %v586
        %v595 = vtanh.pop %v587
        %v596 = vtanh.pop %v588
        %v597 = vtanh.pop %v589
        %v598 = vtanh.pop %v590
        %v599 = vadd.f32 %v591, 1.0
        %v600 = vadd.f32 %v592, 1.0
        %v601 = vadd.f32 %v593, 1.0
        %v602 = vadd.f32 %v594, 1.0
        %v603 = vadd.f32 %v595, 1.0
        %v604 = vadd.f32 %v596, 1.0
        %v605 = vadd.f32 %v597, 1.0
        %v606 = vadd.f32 %v598, 1.0
        %v607 = vmul.f32 %v583, %v599
        %v608 = vmul.f32 %v584, %v600
        %v609 = vmul.f32 %v585, %v601
        %v610 = vmul.f32 %v586, %v602
        %v611 = vmul.f32 %v587, %v603
        %v612 = vmul.f32 %v588, %v604
        %v613 = vmul.f32 %v589, %v605
        %v614 = vmul.f32 %v590, %v606
        %v615 = vld [vmem:[%s5] sm:$0xf]
        %v616 = vld [vmem:[%s5 + $0x4] sm:$0xf]
        %v617 = vpack.c.bf16 %v609, %v607
        %v618 = vpack.c.bf16 %v610, %v608
        %v619 = vpack.c.bf16 %v613, %v611
        %v620 = vpack.c.bf16 %v614, %v612
        %v621 = vld [vmem:[%s6] sm:$0xff]
        %v622 = vld [vmem:[%s6 + $0x8] sm:$0xff]
        %624 = vset.pattern.permute.xlu0 0
        %625 = vperm.xlu0 %624, %v621
        %v626 = vpop.permute.xlu0 %625
        %629 = vset.pattern.permute.xlu0 0
        %630 = vperm.xlu0 %629, %v622
        %v631 = vpop.permute.xlu0 %630
        %v635 = vunpack.c.l.b16 %v615
        %v636 = vunpack.c.l.b16 %v616
        %v637 = vpack.c.b16 %v636, %v635
        %v639 = vsel %vm372, %v637, 0
        %641 = vmatprep.subr.bf16.mxu0 %v618
        %642 = vmatpush1.bf16.msra.mxu0 %v617
        %643 = vmatprep.subr.bf16.mxu0 %v620
        %644 = vmatpush1.bf16.msra.mxu0 %v619
        %645 = vmatprep.subr.bf16.mxu0 0
        %646 = vmatpush1.bf16.msra.mxu0 0
        %647 = vmatprep.subr.bf16.mxu0 0
        %648 = vmatpush1.bf16.msra.mxu0 0
        %649 = vmatprep.subr.bf16.mxu0 0
        %650 = vmatpush1.bf16.msra.mxu0 0
        %651 = vmatprep.subr.bf16.mxu0 0
        %652 = vmatpush1.bf16.msra.mxu0 0
        %653 = vmatprep.subr.bf16.mxu0 0
        %654 = vmatpush1.bf16.msra.mxu0 0
        %655 = vmatprep.subr.bf16.mxu0 0
        %656 = vmatpush1.bf16.msra.mxu0 0
        %657 = vmatprep.subr.bf16.mxu0 0
        %658 = vmatpush1.bf16.msra.mxu0 0
        %659 = vmatprep.subr.bf16.mxu0 0
        %660 = vmatpush1.bf16.msra.mxu0 0
        %661 = vmatprep.subr.bf16.mxu0 0
        %662 = vmatpush1.bf16.msra.mxu0 0
        %663 = vmatprep.subr.bf16.mxu0 0
        %664 = vmatpush1.bf16.msra.mxu0 0
        %665 = vmatprep.subr.bf16.mxu0 0
        %666 = vmatpush1.bf16.msra.mxu0 0
        %667 = vmatprep.subr.bf16.mxu0 0
        %668 = vmatpush1.bf16.msra.mxu0 0
        %669 = vmatprep.subr.bf16.mxu0 0
        %670 = vmatpush1.bf16.msra.mxu0 0
        %671 = vmatprep.subr.bf16.mxu0 0
        %672 = vmatpush1.bf16.msra.mxu0 0
        %673 = vmatprep.mubr.bf16.mxu0 0
        %674 = vmatmul.mubr.bf16.gmra.mrb[0].mxu0 %v639
        %v675 = vpop.f32.mrb[0].mxu0
        %v676 = vadd.f32 %v626, %v675
        %v677 = vpop.f32.mrb[0].mxu0
        %v678 = vadd.f32 %v626, %v677
        %v679 = vpop.f32.mrb[0].mxu0
        %v680 = vadd.f32 %v631, %v679
        %v681 = vpop.f32.mrb[0].mxu0
        %v682 = vadd.f32 %v631, %v681
        %683 = vdwg.mxu0
        %684 = vst [vmem:[%s284] sm:$0xff] %v676
        %685 = vst [vmem:[%s284 + $0x8] sm:$0xff] %v678
        %686 = vst [vmem:[%s284 + $0x10] sm:$0xff] %v680
        %687 = vst [vmem:[%s284 + $0x18] sm:$0xff] %v682
        %s688 = sand.u32 %s181, 1
        %s689 = scalar_lea.sflag [#allocation3], %s688
        %s690 = sand.u32 %s181, 1
        %s691 = smul.addr %s690, 32
        %s692 = scalar_lea.vmem [#allocation2], %s691
        // Predicated region
        $region49: #{tpu_custom_call.1} parent=47 // pred_check
          %p693 = pneg %p191
        $region50: #{tpu_custom_call.1} parent=47 // pred_check_branch
          %695 = sbr.rel (%p693) target = $region52
        $region51: #{tpu_custom_call.1} parent=47 // pred_region
          %s696 = smul.u32 2, %s21
          %s697 = ssub.s32 3, %s696
          %p698 = scmp.lt.s32.totalorder %s697, 2
          %s699 = scalar_select %p698, %s697, 2
          %s700 = smul.u32 256, %s699
          %s702 = ssub.s32 512, %s700
          %703 = vsyncadd %s689, %s702
          %p704 = scmp.ne.s32.totalorder 0, %s700
          %s705 = smul.addr %s696, 128
          %s706 = scalar_lea.hbm %s7, %s705
          %s707 = smul.u32 %s699, 8
          %s708 = smul.u32 %s707, 2
          %s709 = sshll.u32 %s692, 4
          %s710 = int_to_ptr.vmem [resolvable:$true] %s709
          %s711 = sshll.u32 %s708, 4
          %715 = dma.vmem_to_hbm [thread:$0]  (%p704), %s710, %s711, %s706, %s689, 256, 384, %s707
        $region52: #{tpu_custom_call.1} parent=47 // pred_fallthru
          _
      $region48: #{tpu_custom_call.1} parent=5 // pred_fallthru
        _
      %p716 = scmp.le.s32.totalorder 2, %s16
      // Predicated region
      $region53: #{tpu_custom_call.1} parent=5 // pred_check
        %p717 = pneg %p716
      $region54: #{tpu_custom_call.1} parent=5 // pred_check_branch
        %719 = sbr.rel (%p717) target = $region56
      $region55: #{tpu_custom_call.1} parent=5 // pred_region
        %s720 = ssub.s32 %s16, 2
        // Predicated region
        $region57: #{tpu_custom_call.1} parent=55 // pred_check
          %p721 = pneg %p197
        $region58: #{tpu_custom_call.1} parent=55 // pred_check_branch
          %723 = sbr.rel (%p721) target = $region60
        $region59: #{tpu_custom_call.1} parent=55 // pred_region
          %s724 = sand.u32 %s182, 1
          %s725 = scalar_lea.sflag [#allocation3], %s724
          %s726 = sand.u32 %s182, 1
          %s727 = smul.addr %s726, 32
          %s728 = scalar_lea.vmem [#allocation2], %s727
          %729 = dma.done %s725, 512
        $region60: #{tpu_custom_call.1} parent=55 // pred_fallthru
          _
      $region56: #{tpu_custom_call.1} parent=5 // pred_fallthru
        _
    $region6: #{tpu_custom_call.1} parent=1 // loop_footer
      %s20 = sadd.s32 1, %s16
    $region7: #{tpu_custom_call.1} parent=1 // loop_footer_branch
      %15 = sbr.rel target = $region3
    $region8: #{tpu_custom_call.1} parent=1 // loop_exit
      _
    %730 = vsyncpa [#allocation3], 1
    %s731 = scalar_lea.sflag [#allocation3], 1
    %732 = vsyncpa %s731, 1

</llo_original>
